<compile_context>
chip_gen: v6e
topology: v6e:2x2x1
jax: 0.10.0
libtpu: 0.0.40
codegen_flags: <defaults>
</compile_context>

<pallas_src>
import functools

import jax
import jax.numpy as jnp
from jax import lax
from jax.experimental import pallas as pl
from jax.experimental.pallas import tpu as pltpu


def autopad(k, p=None, d=1):
    """Pad to 'same' shape outputs (mirrors the PyTorch helper)."""
    if d > 1:
        k = d * (k - 1) + 1 if isinstance(k, int) else [d * (x - 1) + 1 for x in k]
    if p is None:
        p = k // 2 if isinstance(k, int) else [x // 2 for x in k]
    return p


def _round_up(a, b):
    return (a + b - 1) // b * b


def _conv_bn_silu_kernel(x_ref, w_ref, shift_ref, o_ref, xcol_ref,
                         *, KQ, Wq, Cp, TL, halo):
    # x_ref     : (1, Cp, Lin)     bf16  phased+padded sample, flattened (resident)
    # w_ref     : (C2, KQ*KQ*Cp)   bf16  fused per-tap conv weight, BN scale folded in
    # shift_ref : (C2, 1)          f32   folded BN shift
    # o_ref     : (1, C2, TL)      bf16  lane-dense output tile (TL % 128 == 0)
    # xcol_ref  : (KQ*KQ*Cp, TL)   bf16  VMEM im2col slab (scratch)
    t = pl.program_id(1)
    start = pl.multiple_of(t * TL, 128)

    # One aligned dynamic load of this tile plus its halo; taps are static
    # slices of the in-register block (in-kernel im2col, no HBM blowup).
    xb = x_ref[0, :, pl.ds(start, TL + halo)]                 # (Cp, TL + halo)

    # Pack the KQ*KQ shifted tap windows into the VMEM slab.
    for kh in range(KQ):
        for kw in range(KQ):
            k = kh * KQ + kw
            off = kh * Wq + kw
            xcol_ref[k * Cp:(k + 1) * Cp, :] = xb[:, off:off + TL]

    # Single fused MXU matmul over the KQ*KQ*Cp contraction (f32 accumulation),
    # then BN shift + SiLU epilogue (f32 for accuracy; sigmoid runs on the EUP).
    y = jnp.dot(w_ref[...], xcol_ref[...], preferred_element_type=jnp.float32)
    y = y + shift_ref[...]                                    # BN shift (scale is in w)
    o_ref[0] = (y * jax.nn.sigmoid(y)).astype(o_ref.dtype)    # SiLU, stored as bf16


def conv_forward(x_nchw, weight, gamma, beta, run_mean, run_var,
                 *, stride=1, padding=None, dilation=1, eps=1e-5, tile=512):
    """Conv.forward: act(bn(conv(x))) with act = SiLU. Input NCHW, output NCHW (bf16)."""
    N, C1, H, W = x_nchw.shape
    C2, C1w, K, Kw = weight.shape
    assert C1w == C1 and K == Kw
    assert dilation == 1, "dilation > 1 not implemented"
    s = int(stride)

    p = autopad(K, padding, dilation)
    Hp, Wp = H + 2 * p, W + 2 * p
    Ho = (Hp - K) // s + 1
    Wo = (Wp - K) // s + 1

    # --- stride handled via space-to-depth phase decomposition ---
    # x[s*i+bh, s*j+bw] phases become extra channels; the conv then has stride 1
    # with an effective kernel Kq = ceil(K/s), so the kernel only computes the
    # ~Ho*Wo needed positions (no s^2 dense-compute waste).
    Kq = -(-K // s)                       # ceil(K / s)
    Ce = s * s * C1                       # phase-expanded channel count
    Hq = Ho + Kq - 1                      # phased image extent (covers all taps)
    Wq = Wo + Kq - 1
    eH = s * Hq - Hp                      # extra bottom/right pad so phases tile evenly
    eW = s * Wq - Wp
    assert eH >= 0 and eW >= 0

    Cp = _round_up(Ce, 8)                 # sublane-aligned channel count for the slab
    Lc = Hq * Wq                          # stride-1-equivalent compute positions
    tile = max(128, _round_up(tile, 128))
    TL = min(tile, _round_up(Lc, 128))    # lane-dense spatial tile
    Lc_pad = _round_up(Lc, TL)
    n_tiles = Lc_pad // TL
    halo = _round_up((Kq - 1) * Wq + (Kq - 1), 128)   # max tap offset, 128-aligned
    Lin = Lc_pad + halo

    # Input prep: cast to bf16 BEFORE any pad; one spatial pad, optional phase
    # shuffle (identity when s == 1), one combined channel+halo pad.
    xb = x_nchw.astype(jnp.bfloat16)
    xb = jnp.pad(xb, ((0, 0), (0, 0), (p, p + eH), (p, p + eW)))   # (N,C1,s*Hq,s*Wq)
    if s > 1:
        xb = xb.reshape(N, C1, Hq, s, Wq, s)
        xb = xb.transpose(0, 3, 5, 1, 2, 4).reshape(N, Ce, Hq, Wq)  # space-to-depth
    xflat = xb.reshape(N, Ce, Lc)
    xflat = jnp.pad(xflat, ((0, 0), (0, Cp - Ce), (0, Lin - Lc)))   # (N, Cp, Lin)

    # Weights: scatter the (kh,kw) taps into (ah,aw)x(bh,bw) phase taps, fold
    # eval-mode BN scale in f32, pad channels, flatten to (C2, Kq*Kq*Cp).
    scale = gamma / jnp.sqrt(run_var + eps)                         # (C2,)
    w_eff = jnp.zeros((C2, Kq, Kq, s, s, C1), jnp.float32)
    for ah in range(Kq):
        for aw in range(Kq):
            for bh in range(s):
                for bw in range(s):
                    kh, kw = s * ah + bh, s * aw + bw
                    if kh < K and kw < K:
                        w_eff = w_eff.at[:, ah, aw, bh, bw, :].set(weight[:, :, kh, kw])
    w_eff = w_eff * scale[:, None, None, None, None, None]
    w_eff = w_eff.reshape(C2, Kq * Kq, Ce)
    w2 = jnp.pad(w_eff, ((0, 0), (0, 0), (0, Cp - Ce)))
    KKCp = Kq * Kq * Cp
    w2 = w2.reshape(C2, KKCp).astype(jnp.bfloat16)
    shift = (beta - run_mean * scale).reshape(C2, 1).astype(jnp.float32)

    kernel = functools.partial(_conv_bn_silu_kernel,
                               KQ=Kq, Wq=Wq, Cp=Cp, TL=TL, halo=halo)

    # Explicit VMEM budget: double-buffered input/output + resident weights +
    # shift + im2col slab, with headroom; min 32 MiB (covers v5e's 16 MiB
    # default), capped at 64 MiB so it is always valid on v7x.
    needed = (2 * Cp * Lin * 2 + 2 * C2 * KKCp * 2 + 2 * 8 * 128 * 4
              + 2 * C2 * TL * 2 + KKCp * TL * 2)
    vmem_limit = int(min(max(2 * needed + (1 << 20), 32 << 20), 64 << 20))

    out = pl.pallas_call(
        kernel,
        out_shape=jax.ShapeDtypeStruct((N, C2, Lc_pad), jnp.bfloat16),
        grid=(N, n_tiles),
        in_specs=[
            pl.BlockSpec((1, Cp, Lin), lambda n, t: (n, 0, 0)),     # resident per sample
            pl.BlockSpec((C2, KKCp), lambda n, t: (0, 0)),          # resident weights
            pl.BlockSpec((C2, 1), lambda n, t: (0, 0)),
        ],
        out_specs=pl.BlockSpec((1, C2, TL), lambda n, t: (n, 0, t)),
        scratch_shapes=[pltpu.VMEM((KKCp, TL), jnp.bfloat16)],      # im2col slab
        compiler_params=pltpu.CompilerParams(
            dimension_semantics=("parallel", "parallel"),
            vmem_limit_bytes=vmem_limit),
    )(xflat, w2, shift)

    # (N, C2, Hq*Wq) -> NCHW; drop padded / boundary-garbage positions.
    return out[:, :, :Lc].reshape(N, C2, Hq, Wq)[:, :, :Ho, :Wo]


def _reference(x_nchw, weight, gamma, beta, run_mean, run_var, *, stride=1, eps=1e-5):
    """Pure-JAX reference: conv2d (no bias) + eval-mode BN + SiLU, all f32."""
    K = weight.shape[-1]
    p = autopad(K)
    y = lax.conv_general_dilated(
        x_nchw, weight, window_strides=(stride, stride),
        padding=[(p, p), (p, p)],
        dimension_numbers=("NCHW", "OIHW", "NCHW"))
    y = (y - run_mean[None, :, None, None]) / jnp.sqrt(run_var + eps)[None, :, None, None]
    y = y * gamma[None, :, None, None] + beta[None, :, None, None]
    return y * jax.nn.sigmoid(y)


if __name__ == "__main__":
    # Conv(c1=4, c2=8, k=3) on a (2, 4, 16, 16) NCHW input.
    N, C1, C2, K, H, W = 2, 4, 8, 3, 16, 16

    key = jax.random.PRNGKey(0)
    kx, kw, kg, kb, km, kv = jax.random.split(key, 6)

    x = jax.random.normal(kx, (N, C1, H, W), jnp.float32)
    weight = jax.random.normal(kw, (C2, C1, K, K), jnp.float32) * 0.1
    gamma = 1.0 + 0.1 * jax.random.normal(kg, (C2,), jnp.float32)
    beta = 0.1 * jax.random.normal(kb, (C2,), jnp.float32)
    run_mean = 0.1 * jax.random.normal(km, (C2,), jnp.float32)
    run_var = 0.5 + jnp.abs(jax.random.normal(kv, (C2,), jnp.float32)) * 0.5

    # stride=1 ('same' conv)
    out1 = jax.block_until_ready(
        conv_forward(x, weight, gamma, beta, run_mean, run_var, stride=1))
    ref1 = _reference(x, weight, gamma, beta, run_mean, run_var, stride=1)
    assert out1.shape == (N, C2, H, W), out1.shape
    err1 = jnp.max(jnp.abs(out1.astype(jnp.float32) - ref1))
    # bf16 operands + bf16 output (f32 MXU accumulation) -> loosened tolerance.
    assert jnp.allclose(out1.astype(jnp.float32), ref1, atol=5e-2, rtol=5e-2), \
        f"stride=1 max abs err = {err1}"

    # stride=2 (downsampling conv; exercises the phase-decomposed path)
    out2 = jax.block_until_ready(
        conv_forward(x, weight, gamma, beta, run_mean, run_var, stride=2))
    ref2 = _reference(x, weight, gamma, beta, run_mean, run_var, stride=2)
    assert out2.shape == (N, C2, H // 2, W // 2), out2.shape
    err2 = jnp.max(jnp.abs(out2.astype(jnp.float32) - ref2))
    assert jnp.allclose(out2.astype(jnp.float32), ref2, atol=5e-2, rtol=5e-2), \
        f"stride=2 max abs err = {err2}"

    print("KERNEL_OK")
</pallas_src>

<mosaic_0001>
module attributes {stable_mosaic.version = 11 : i64} {
  func.func @_conv_bn_silu_kernel(%arg0: i32, %arg1: i32, %arg2: memref<1x8x512xbf16, #tpu.memory_space<vmem>>, %arg3: memref<8x72xbf16, #tpu.memory_space<vmem>>, %arg4: memref<8x1xf32, #tpu.memory_space<vmem>>, %arg5: memref<1x8x384xbf16, #tpu.memory_space<vmem>>, %arg6: memref<72x384xbf16, #tpu.memory_space<vmem>>) attributes {dimension_semantics = [#tpu.dimension_semantics<parallel>, #tpu.dimension_semantics<parallel>], iteration_bounds = array<i64: 2, 1>, scalar_prefetch = 0 : i64, scratch_operands = 1 : i64, tpu.core_type = #tpu.core_type<tc>, window_params = [{transform_indices = @transform_0, window_bounds = array<i64: 1, 8, 512>}, {pipeline_mode = #tpu.pipeline_mode<synchronous>, transform_indices = @transform_1, window_bounds = array<i64: 8, 72>}, {pipeline_mode = #tpu.pipeline_mode<synchronous>, transform_indices = @transform_2, window_bounds = array<i64: 8, 1>}, {transform_indices = @transform_3, window_bounds = array<i64: 1, 8, 384>}]} {
    %c384_i32 = arith.constant 384 : i32
    %0 = arith.muli %arg1, %c384_i32 : i32
    %1 = tpu.assume_multiple %0, 128 : i32
    %c0 = arith.constant 0 : index
    %c0_0 = arith.constant 0 : index
    %2 = arith.index_cast %1 : i32 to index
    %3 = vector.load %arg2[%c0, %c0_0, %2] : memref<1x8x512xbf16, #tpu.memory_space<vmem>>, vector<1x8x512xbf16>
    %4 = vector.shape_cast %3 : vector<1x8x512xbf16> to vector<8x512xbf16>
    %5 = vector.extract_strided_slice %4 {offsets = [0, 0], sizes = [8, 384], strides = [1, 1]} : vector<8x512xbf16> to vector<8x384xbf16>
    %c0_1 = arith.constant 0 : index
    %c0_2 = arith.constant 0 : index
    %6 = vector.load %arg6[%c0_1, %c0_2] : memref<72x384xbf16, #tpu.memory_space<vmem>>, vector<8x384xbf16>
    tpu.vector_store %arg6[%c0_1, %c0_2], %5 {strides = array<i32>} : memref<72x384xbf16, #tpu.memory_space<vmem>>, vector<8x384xbf16>,
    %7 = vector.extract_strided_slice %4 {offsets = [0, 1], sizes = [8, 384], strides = [1, 1]} : vector<8x512xbf16> to vector<8x384xbf16>
    %c8 = arith.constant 8 : index
    %c0_3 = arith.constant 0 : index
    %8 = vector.load %arg6[%c8, %c0_3] : memref<72x384xbf16, #tpu.memory_space<vmem>>, vector<8x384xbf16>
    tpu.vector_store %arg6[%c8, %c0_3], %7 {strides = array<i32>} : memref<72x384xbf16, #tpu.memory_space<vmem>>, vector<8x384xbf16>,
    %9 = vector.extract_strided_slice %4 {offsets = [0, 2], sizes = [8, 384], strides = [1, 1]} : vector<8x512xbf16> to vector<8x384xbf16>
    %c16 = arith.constant 16 : index
    %c0_4 = arith.constant 0 : index
    %10 = vector.load %arg6[%c16, %c0_4] : memref<72x384xbf16, #tpu.memory_space<vmem>>, vector<8x384xbf16>
    tpu.vector_store %arg6[%c16, %c0_4], %9 {strides = array<i32>} : memref<72x384xbf16, #tpu.memory_space<vmem>>, vector<8x384xbf16>,
    %11 = vector.extract_strided_slice %4 {offsets = [0, 18], sizes = [8, 384], strides = [1, 1]} : vector<8x512xbf16> to vector<8x384xbf16>
    %c24 = arith.constant 24 : index
    %c0_5 = arith.constant 0 : index
    %12 = vector.load %arg6[%c24, %c0_5] : memref<72x384xbf16, #tpu.memory_space<vmem>>, vector<8x384xbf16>
    tpu.vector_store %arg6[%c24, %c0_5], %11 {strides = array<i32>} : memref<72x384xbf16, #tpu.memory_space<vmem>>, vector<8x384xbf16>,
    %13 = vector.extract_strided_slice %4 {offsets = [0, 19], sizes = [8, 384], strides = [1, 1]} : vector<8x512xbf16> to vector<8x384xbf16>
    %c32 = arith.constant 32 : index
    %c0_6 = arith.constant 0 : index
    %14 = vector.load %arg6[%c32, %c0_6] : memref<72x384xbf16, #tpu.memory_space<vmem>>, vector<8x384xbf16>
    tpu.vector_store %arg6[%c32, %c0_6], %13 {strides = array<i32>} : memref<72x384xbf16, #tpu.memory_space<vmem>>, vector<8x384xbf16>,
    %15 = vector.extract_strided_slice %4 {offsets = [0, 20], sizes = [8, 384], strides = [1, 1]} : vector<8x512xbf16> to vector<8x384xbf16>
    %c40 = arith.constant 40 : index
    %c0_7 = arith.constant 0 : index
    %16 = vector.load %arg6[%c40, %c0_7] : memref<72x384xbf16, #tpu.memory_space<vmem>>, vector<8x384xbf16>
    tpu.vector_store %arg6[%c40, %c0_7], %15 {strides = array<i32>} : memref<72x384xbf16, #tpu.memory_space<vmem>>, vector<8x384xbf16>,
    %17 = vector.extract_strided_slice %4 {offsets = [0, 36], sizes = [8, 384], strides = [1, 1]} : vector<8x512xbf16> to vector<8x384xbf16>
    %c48 = arith.constant 48 : index
    %c0_8 = arith.constant 0 : index
    %18 = vector.load %arg6[%c48, %c0_8] : memref<72x384xbf16, #tpu.memory_space<vmem>>, vector<8x384xbf16>
    tpu.vector_store %arg6[%c48, %c0_8], %17 {strides = array<i32>} : memref<72x384xbf16, #tpu.memory_space<vmem>>, vector<8x384xbf16>,
    %19 = vector.extract_strided_slice %4 {offsets = [0, 37], sizes = [8, 384], strides = [1, 1]} : vector<8x512xbf16> to vector<8x384xbf16>
    %c56 = arith.constant 56 : index
    %c0_9 = arith.constant 0 : index
    %20 = vector.load %arg6[%c56, %c0_9] : memref<72x384xbf16, #tpu.memory_space<vmem>>, vector<8x384xbf16>
    tpu.vector_store %arg6[%c56, %c0_9], %19 {strides = array<i32>} : memref<72x384xbf16, #tpu.memory_space<vmem>>, vector<8x384xbf16>,
    %21 = vector.extract_strided_slice %4 {offsets = [0, 38], sizes = [8, 384], strides = [1, 1]} : vector<8x512xbf16> to vector<8x384xbf16>
    %c64 = arith.constant 64 : index
    %c0_10 = arith.constant 0 : index
    %22 = vector.load %arg6[%c64, %c0_10] : memref<72x384xbf16, #tpu.memory_space<vmem>>, vector<8x384xbf16>
    tpu.vector_store %arg6[%c64, %c0_10], %21 {strides = array<i32>} : memref<72x384xbf16, #tpu.memory_space<vmem>>, vector<8x384xbf16>,
    %c0_11 = arith.constant 0 : index
    %c0_12 = arith.constant 0 : index
    %23 = vector.load %arg3[%c0_11, %c0_12] : memref<8x72xbf16, #tpu.memory_space<vmem>>, vector<8x72xbf16>
    %c0_13 = arith.constant 0 : index
    %c0_14 = arith.constant 0 : index
    %24 = vector.load %arg6[%c0_13, %c0_14] : memref<72x384xbf16, #tpu.memory_space<vmem>>, vector<72x384xbf16>
    %cst = arith.constant dense<0.000000e+00> : vector<8x384xf32>
    %25 = tpu.matmul %23, %24, %cst {dimension_numbers = #tpu.dot_dimension_numbers<[1], [0], [0], [1], [0, 0, 1, 1], [], []>} : vector<8x72xbf16>, vector<72x384xbf16>, vector<8x384xf32> -> vector<8x384xf32>
    %c0_15 = arith.constant 0 : index
    %c0_16 = arith.constant 0 : index
    %26 = vector.load %arg4[%c0_15, %c0_16] : memref<8x1xf32, #tpu.memory_space<vmem>>, vector<8x1xf32>
    %27 = vector.broadcast %26 : vector<8x1xf32> to vector<8x384xf32>
    %28 = arith.addf %25, %27 : vector<8x384xf32>
    %29 = arith.negf %28 : vector<8x384xf32>
    %30 = math.exp %29 : vector<8x384xf32>
    %cst_17 = arith.constant 1.000000e+00 : f32
    %31 = vector.broadcast %cst_17 : f32 to vector<8x384xf32>
    %32 = arith.addf %31, %30 : vector<8x384xf32>
    %33 = arith.divf %31, %32 : vector<8x384xf32>
    %34 = arith.mulf %28, %33 : vector<8x384xf32>
    %35 = arith.truncf %34 : vector<8x384xf32> to vector<8x384xbf16>
    %c0_18 = arith.constant 0 : index
    %c0_19 = arith.constant 0 : index
    %c0_20 = arith.constant 0 : index
    %36 = vector.load %arg5[%c0_18, %c0_19, %c0_20] : memref<1x8x384xbf16, #tpu.memory_space<vmem>>, vector<1x8x384xbf16>
    %37 = vector.shape_cast %36 : vector<1x8x384xbf16> to vector<8x384xbf16>
    %38 = vector.shape_cast %35 : vector<8x384xbf16> to vector<1x8x384xbf16>
    tpu.vector_store %arg5[%c0_18, %c0_19, %c0_20], %38 {strides = array<i32>} : memref<1x8x384xbf16, #tpu.memory_space<vmem>>, vector<1x8x384xbf16>,
    return
  }
  func.func @transform_0(%arg0: i32, %arg1: i32) -> (i32, i32, i32) {
    %c0_i32 = arith.constant 0 : i32
    %c0_i32_0 = arith.constant 0 : i32
    %c0_i32_1 = arith.constant 0 : i32
    return %arg0, %c0_i32, %c0_i32_0 : i32, i32, i32
  }
  func.func @transform_1(%arg0: i32, %arg1: i32) -> (i32, i32) {
    %c0_i32 = arith.constant 0 : i32
    %c0_i32_0 = arith.constant 0 : i32
    %c0_i32_1 = arith.constant 0 : i32
    return %c0_i32, %c0_i32_0 : i32, i32
  }
  func.func @transform_2(%arg0: i32, %arg1: i32) -> (i32, i32) {
    %c0_i32 = arith.constant 0 : i32
    %c0_i32_0 = arith.constant 0 : i32
    %c0_i32_1 = arith.constant 0 : i32
    return %c0_i32, %c0_i32_0 : i32, i32
  }
  func.func @transform_3(%arg0: i32, %arg1: i32) -> (i32, i32, i32) {
    %c0_i32 = arith.constant 0 : i32
    %c0_i32_0 = arith.constant 0 : i32
    return %arg0, %c0_i32, %arg1 : i32, i32, i32
  }
}

</mosaic_0001>

<llo_original>
// kernel: tpu_custom_call.1
$region0: #{tpu_custom_call.1}
  #allocation0 [shape = 'u32[]', space=smem, size = 0x4, offset = 0x4, fixed_abs, tag = 'smem constant byte address 0x4 - core index']
  #allocation1 [shape = 'u32[144,128]{1,0:T(1,128)}', space=vmem, size = 0x12000, scoped, tag = 'internal scratch']
  #allocation2 [shape = 'bf16[72,384]{1,0:T(8,128)(2,1)}', space=vmem, size = 0xd800, scoped, tag = 'scratch operand']
  %s0 = inlined_call_operand.hbm [shape: bf16[2,8,512], index: 0, kind: input, shape index: {}]
  %s1 = inlined_call_operand.vmem [shape: bf16[8,72], index: 1, kind: input, shape index: {}]
  %s2 = inlined_call_operand.vmem [shape: f32[8,1], index: 2, kind: input, shape index: {}]
  %s3 = inlined_call_operand.hbm [shape: bf16[2,8,384], index: 3, kind: output, shape index: {}]
  %s4 = sld [smem:[#allocation0]]
  $region49: #{tpu_custom_call.1} parent=0
    _
  %s6 = ssub.s32 1, %s4
  %s7 = scalar_select 0, %s6, %s4
  $region1: #{tpu_custom_call.1} parent=0
    #allocation3 [shape = 'u8[16384]{0}', space=vmem, size = 0x4000, scoped, tag = 'input window, operand 0']
    #allocation4 [shape = 's32[2]{0}', space=sflag, size = 0x8, scoped, tag = 'scoped memory for tpu_custom_call.1']
    #allocation5 [shape = 's32[2]{0}', space=sflag, size = 0x8, scoped, tag = 'scoped memory for tpu_custom_call.1']
    #allocation6 [shape = 'u8[12288]{0}', space=vmem, size = 0x3000, scoped, tag = 'output window, operand 0']
    %8 = vsyncpa [#allocation4], 0
    %s9 = scalar_lea.sflag [#allocation4], 1
    %10 = vsyncpa %s9, 0
    %11 = vsyncpa [#allocation5], 0
    %s12 = scalar_lea.sflag [#allocation5], 1
    %13 = vsyncpa %s12, 0
    loop: start=0, step=1, limit=4
    $region2: #{tpu_custom_call.1} parent=1 // loop_pre_header
      _
    $region3: #{tpu_custom_call.1} parent=1 // loop_header
      %s15 = sphi 0, %s19
      %p16 = scmp.ge.s32.totalorder %s15, 4
      %s22 = sphi 0, %s34
      %s23 = sphi 0, %s30
      %s24 = sphi 0, %s22
      %s25 = sphi 0, %s23
      %s26 = sphi 0, %s24
      %s27 = sphi 0, %s25
      %s37 = sphi 0, %s39
      %s40 = sphi 0, %s37
      %s41 = sphi 0, %s40
      %s57 = sphi 0, %s41
      %s61 = sphi 0, %s61
      %s63 = sphi 0, %s61
      %s64 = sphi 0, %s63
      %s78 = sphi 0, %s64
      %s82 = sphi 0, %s82
      %s84 = sphi 0, %s82
      %s85 = sphi 0, %s84
      %s99 = sphi 0, %s85
      %s107 = sphi 0, %s109
      %s110 = sphi 0, %s107
      %s111 = sphi 0, %s110
      %s127 = sphi 0, %s111
    $region4: #{tpu_custom_call.1} parent=1 // loop_header_branch
      %18 = sbr.rel (%p16) target = $region8
    $region5: #{tpu_custom_call.1} parent=1 // loop_body
      %s20 = ssub.s32 %s15, 1
      %s21 = ssub.s32 %s15, 2
      %s28 = sadd.s32 1, %s23
      %p29 = scmp.ge.s32.totalorder %s28, 1
      %s30 = scalar_select %p29, 0, %s28
      %s31 = sadd.s32 1, %s22
      %s32 = scalar_select %p29, %s31, %s22
      %p33 = scmp.ge.s32.totalorder %s32, 2
      %s34 = scalar_select %p33, 0, %s32
      %s35 = ssub.s32 %s22, %s34
      %p36 = scmp.eq.s32.totalorder %s35, 0
      %s38 = sadd.s32 %s37, 1
      %s39 = scalar_select %p36, %s37, %s38
      %p42 = pneg %p36
      %p43 = scmp.eq.s32.totalorder %s15, 1
      %p44 = por %p42, %p43
      %p45 = scmp.ne.s32.totalorder %s37, %s40
      %p46 = scmp.eq.s32.totalorder %s15, 0
      %p47 = por %p45, %p46
      %p48 = scmp.ne.s32.totalorder %s37, %s40
      %p49 = scmp.eq.s32.totalorder %s20, 1
      %p50 = por %p48, %p49
      %p51 = scmp.ne.s32.totalorder %s40, %s41
      %p52 = scmp.eq.s32.totalorder %s20, 0
      %p53 = por %p51, %p52
      %p54 = scmp.ne.s32.totalorder %s40, %s41
      %p55 = scmp.eq.s32.totalorder %s21, 1
      %p56 = por %p54, %p55
      %p58 = scmp.ne.s32.totalorder %s41, %s57
      %p59 = scmp.eq.s32.totalorder %s21, 0
      %p60 = por %p58, %p59
      %s62 = sadd.s32 %s61, 1
      %p65 = scmp.eq.s32.totalorder %s15, 1
      %p66 = scmp.ne.s32.totalorder %s61, %s63
      %p67 = scmp.eq.s32.totalorder %s15, 0
      %p68 = por %p66, %p67
      %p69 = scmp.ne.s32.totalorder %s61, %s63
      %p70 = scmp.eq.s32.totalorder %s20, 1
      %p71 = por %p69, %p70
      %p72 = scmp.ne.s32.totalorder %s63, %s64
      %p73 = scmp.eq.s32.totalorder %s20, 0
      %p74 = por %p72, %p73
      %p75 = scmp.ne.s32.totalorder %s63, %s64
      %p76 = scmp.eq.s32.totalorder %s21, 1
      %p77 = por %p75, %p76
      %p79 = scmp.ne.s32.totalorder %s64, %s78
      %p80 = scmp.eq.s32.totalorder %s21, 0
      %p81 = por %p79, %p80
      %s83 = sadd.s32 %s82, 1
      %p86 = scmp.eq.s32.totalorder %s15, 1
      %p87 = scmp.ne.s32.totalorder %s82, %s84
      %p88 = scmp.eq.s32.totalorder %s15, 0
      %p89 = por %p87, %p88
      %p90 = scmp.ne.s32.totalorder %s82, %s84
      %p91 = scmp.eq.s32.totalorder %s20, 1
      %p92 = por %p90, %p91
      %p93 = scmp.ne.s32.totalorder %s84, %s85
      %p94 = scmp.eq.s32.totalorder %s20, 0
      %p95 = por %p93, %p94
      %p96 = scmp.ne.s32.totalorder %s84, %s85
      %p97 = scmp.eq.s32.totalorder %s21, 1
      %p98 = por %p96, %p97
      %p100 = scmp.ne.s32.totalorder %s85, %s99
      %p101 = scmp.eq.s32.totalorder %s21, 0
      %p102 = por %p100, %p101
      %s103 = ssub.s32 %s22, %s34
      %s104 = ssub.s32 %s23, %s30
      %s105 = sor.u32 %s103, %s104
      %p106 = scmp.eq.s32.totalorder %s105, 0
      %s108 = sadd.s32 %s107, 1
      %s109 = scalar_select %p106, %s107, %s108
      %p112 = pneg %p106
      %p113 = scmp.eq.s32.totalorder %s15, 1
      %p114 = por %p112, %p113
      %p115 = scmp.ne.s32.totalorder %s107, %s110
      %p116 = scmp.eq.s32.totalorder %s15, 0
      %p117 = por %p115, %p116
      %p118 = scmp.ne.s32.totalorder %s107, %s110
      %p119 = scmp.eq.s32.totalorder %s20, 1
      %p120 = por %p118, %p119
      %p121 = scmp.ne.s32.totalorder %s110, %s111
      %p122 = scmp.eq.s32.totalorder %s20, 0
      %p123 = por %p121, %p122
      %p124 = scmp.ne.s32.totalorder %s110, %s111
      %p125 = scmp.eq.s32.totalorder %s21, 1
      %p126 = por %p124, %p125
      %p128 = scmp.ne.s32.totalorder %s111, %s127
      %p129 = scmp.eq.s32.totalorder %s21, 0
      %p130 = por %p128, %p129
      %p131 = scmp.le.s32.totalorder 1, %s15
      %p132 = scmp.lt.s32.totalorder %s15, 3
      %p133 = pnand %p131, %p132
      %p134 = pneg %p133
      // Predicated region
      $region9: #{tpu_custom_call.1} parent=5 // pred_check
        _
      $region10: #{tpu_custom_call.1} parent=5 // pred_check_branch
        %136 = sbr.rel (%p133) target = $region12
      $region11: #{tpu_custom_call.1} parent=5 // pred_region
        %s137 = ssub.s32 %s15, 1
        // Predicated region
        $region13: #{tpu_custom_call.1} parent=11 // pred_check
          %p138 = pneg %p74
        $region14: #{tpu_custom_call.1} parent=11 // pred_check_branch
          %140 = sbr.rel (%p138) target = $region16
        $region15: #{tpu_custom_call.1} parent=11 // pred_region
          _
        $region16: #{tpu_custom_call.1} parent=11 // pred_fallthru
          _
        // Predicated region
        $region17: #{tpu_custom_call.1} parent=11 // pred_check
          %p141 = pneg %p95
        $region18: #{tpu_custom_call.1} parent=11 // pred_check_branch
          %143 = sbr.rel (%p141) target = $region20
        $region19: #{tpu_custom_call.1} parent=11 // pred_region
          _
        $region20: #{tpu_custom_call.1} parent=11 // pred_fallthru
          _
      $region12: #{tpu_custom_call.1} parent=5 // pred_fallthru
        _
      %p144 = scmp.lt.s32.totalorder %s15, 2
      // Predicated region
      $region21: #{tpu_custom_call.1} parent=5 // pred_check
        %p145 = pneg %p144
      $region22: #{tpu_custom_call.1} parent=5 // pred_check_branch
        %147 = sbr.rel (%p145) target = $region24
      $region23: #{tpu_custom_call.1} parent=5 // pred_region
        // Predicated region
        $region25: #{tpu_custom_call.1} parent=23 // pred_check
          %p148 = pneg %p47
        $region26: #{tpu_custom_call.1} parent=23 // pred_check_branch
          %150 = sbr.rel (%p148) target = $region28
        $region27: #{tpu_custom_call.1} parent=23 // pred_region
          %s151 = sand.u32 %s37, 1
          %s152 = scalar_lea.sflag [#allocation4], %s151
          %s153 = sand.u32 %s37, 1
          %s154 = smul.addr %s153, 16
          %s155 = scalar_lea.vmem [#allocation3], %s154
          %s157 = ssub.s32 256, 256
          %158 = vsyncadd %s152, %s157
          %s159 = smul.addr %s22, 4
          %s160 = smul.addr %s159, 64
          %s161 = scalar_lea.hbm %s0, %s160
          %s163 = sshll.u32 %s155, 4
          %s164 = int_to_ptr.vmem [resolvable:$true] %s163
          %166 = dma.hbm_to_vmem [thread:$0]  %s161, 256, %s164, %s152
        $region28: #{tpu_custom_call.1} parent=23 // pred_fallthru
          _
      $region24: #{tpu_custom_call.1} parent=5 // pred_fallthru
        _
      %p167 = scmp.le.s32.totalorder 1, %s15
      %p168 = scmp.lt.s32.totalorder %s15, 3
      %p169 = pnand %p167, %p168
      %p170 = pneg %p169
      // Predicated region
      $region29: #{tpu_custom_call.1} parent=5 // pred_check
        _
      $region30: #{tpu_custom_call.1} parent=5 // pred_check_branch
        %172 = sbr.rel (%p169) target = $region32
      $region31: #{tpu_custom_call.1} parent=5 // pred_region
        %s173 = ssub.s32 %s15, 1
        %s174 = sand.u32 %s40, 1
        %s175 = scalar_lea.sflag [#allocation4], %s174
        %s176 = sand.u32 %s40, 1
        %s177 = smul.addr %s176, 16
        %s178 = scalar_lea.vmem [#allocation3], %s177
        // Predicated region
        $region33: #{tpu_custom_call.1} parent=31 // pred_check
          %p179 = pneg %p53
        $region34: #{tpu_custom_call.1} parent=31 // pred_check_branch
          %181 = sbr.rel (%p179) target = $region36
        $region35: #{tpu_custom_call.1} parent=31 // pred_region
          %182 = dma.done %s175, 256
        $region36: #{tpu_custom_call.1} parent=31 // pred_fallthru
          _
        %s183 = sand.u32 %s40, 1
        %s184 = scalar_lea.sflag [#allocation4], %s183
        %s185 = sand.u32 %s40, 1
        %s186 = smul.addr %s185, 16
        %s187 = scalar_lea.vmem [#allocation3], %s186
        %p188 = pneg %p53
        %p189 = pneg %p50
        %p190 = pneg %p74
        %p191 = pneg %p71
        %p192 = pneg %p95
        %p193 = pneg %p92
        %p194 = pneg %p123
        %p195 = pneg %p120
        %s196 = sand.u32 %s110, 1
        %s197 = scalar_lea.sflag [#allocation5], %s196
        %s198 = sand.u32 %s110, 1
        %s199 = smul.addr %s198, 12
        %s200 = scalar_lea.vmem [#allocation6], %s199
        %s201 = smul.u32 3, %s25
        %s203 = smul.u32 %s25, 384
        %s204 = sshra.s32 %s203, 7
        %s205 = sand.u32 %s203, 127
        %s206 = smul.addr %s204, 4
        %s207 = scalar_lea.vmem %s178, %s206 [#allocation3]
        %v208 = vld [vmem:[%s207] sm:$0xff]
        %v209 = vld [vmem:[%s207 + $0x8] sm:$0xff]
        %210 = vst [vmem:[#allocation2] sm:$0xff] %v208
        %211 = vst [vmem:[#allocation2 + $0x8] sm:$0xf] %v209
        %214 = vrot.lane.b32.xlu0 %v208, 127
        %v215 = vpop.permute.xlu0 %214
        %216 = vrot.lane.b32.xlu0 %v209, 127
        %v217 = vpop.permute.xlu0 %216
        %v218 = vrot.slane %v215, 4
        %v219 = vrot.slane %v217, 4
        %vm220 = vcmask 1043456
        %v221 = vsel %vm220, %v218, %v219
        %vm222 = vcmask 1039360
        %v223 = vsel %vm222, %v215, %v221
        %v224 = vsel %vm222, %v217, %v219
        %227 = vst [vmem:[#allocation2 + $0xc] sm:$0xff] %v223
        %228 = vst [vmem:[#allocation2 + $0x14] sm:$0xf] %v224
        %229 = vrot.lane.b32.xlu0 %v208, 126
        %v230 = vpop.permute.xlu0 %229
        %231 = vrot.lane.b32.xlu0 %v209, 126
        %v232 = vpop.permute.xlu0 %231
        %v233 = vrot.slane %v230, 4
        %v234 = vrot.slane %v232, 4
        %v235 = vsel %vm220, %v233, %v234
        %vm236 = vcmask 1031168
        %v237 = vsel %vm236, %v230, %v235
        %v238 = vsel %vm236, %v232, %v234
        %241 = vst [vmem:[#allocation2 + $0x18] sm:$0xff] %v237
        %242 = vst [vmem:[#allocation2 + $0x20] sm:$0xf] %v238
        %243 = vrot.lane.b32.xlu0 %v208, 110
        %v244 = vpop.permute.xlu0 %243
        %245 = vrot.lane.b32.xlu0 %v209, 110
        %v246 = vpop.permute.xlu0 %245
        %v247 = vrot.slane %v244, 4
        %v248 = vrot.slane %v246, 4
        %v249 = vsel %vm220, %v247, %v248
        %vm250 = vcmask 900096
        %v251 = vsel %vm250, %v244, %v249
        %v252 = vsel %vm250, %v246, %v248
        %255 = vst [vmem:[#allocation2 + $0x24] sm:$0xff] %v251
        %256 = vst [vmem:[#allocation2 + $0x2c] sm:$0xf] %v252
        %257 = vrot.lane.b32.xlu0 %v208, 109
        %v258 = vpop.permute.xlu0 %257
        %259 = vrot.lane.b32.xlu0 %v209, 109
        %v260 = vpop.permute.xlu0 %259
        %v261 = vrot.slane %v258, 4
        %v262 = vrot.slane %v260, 4
        %v263 = vsel %vm220, %v261, %v262
        %vm264 = vcmask 891904
        %v265 = vsel %vm264, %v258, %v263
        %v266 = vsel %vm264, %v260, %v262
        %269 = vst [vmem:[#allocation2 + $0x30] sm:$0xff] %v265
        %270 = vst [vmem:[#allocation2 + $0x38] sm:$0xf] %v266
        %271 = vrot.lane.b32.xlu0 %v208, 108
        %v272 = vpop.permute.xlu0 %271
        %273 = vrot.lane.b32.xlu0 %v209, 108
        %v274 = vpop.permute.xlu0 %273
        %v275 = vrot.slane %v272, 4
        %v276 = vrot.slane %v274, 4
        %v277 = vsel %vm220, %v275, %v276
        %vm278 = vcmask 883712
        %v279 = vsel %vm278, %v272, %v277
        %v280 = vsel %vm278, %v274, %v276
        %283 = vst [vmem:[#allocation2 + $0x3c] sm:$0xff] %v279
        %284 = vst [vmem:[#allocation2 + $0x44] sm:$0xf] %v280
        %285 = vrot.lane.b32.xlu0 %v208, 92
        %v286 = vpop.permute.xlu0 %285
        %287 = vrot.lane.b32.xlu0 %v209, 92
        %v288 = vpop.permute.xlu0 %287
        %v289 = vrot.slane %v286, 4
        %v290 = vrot.slane %v288, 4
        %v291 = vsel %vm220, %v289, %v290
        %vm292 = vcmask 752640
        %v293 = vsel %vm292, %v286, %v291
        %v294 = vsel %vm292, %v288, %v290
        %297 = vst [vmem:[#allocation2 + $0x48] sm:$0xff] %v293
        %298 = vst [vmem:[#allocation2 + $0x50] sm:$0xf] %v294
        %299 = vrot.lane.b32.xlu0 %v208, 91
        %v300 = vpop.permute.xlu0 %299
        %301 = vrot.lane.b32.xlu0 %v209, 91
        %v302 = vpop.permute.xlu0 %301
        %v303 = vrot.slane %v300, 4
        %v304 = vrot.slane %v302, 4
        %v305 = vsel %vm220, %v303, %v304
        %vm306 = vcmask 744448
        %v307 = vsel %vm306, %v300, %v305
        %v308 = vsel %vm306, %v302, %v304
        %311 = vst [vmem:[#allocation2 + $0x54] sm:$0xff] %v307
        %312 = vst [vmem:[#allocation2 + $0x5c] sm:$0xf] %v308
        %313 = vrot.lane.b32.xlu0 %v208, 90
        %v314 = vpop.permute.xlu0 %313
        %315 = vrot.lane.b32.xlu0 %v209, 90
        %v316 = vpop.permute.xlu0 %315
        %v317 = vrot.slane %v314, 4
        %v318 = vrot.slane %v316, 4
        %v319 = vsel %vm220, %v317, %v318
        %vm320 = vcmask 736256
        %v321 = vsel %vm320, %v314, %v319
        %v322 = vsel %vm320, %v316, %v318
        %325 = vst [vmem:[#allocation2 + $0x60] sm:$0xff] %v321
        %326 = vst [vmem:[#allocation2 + $0x68] sm:$0xf] %v322
        %v327 = vld [vmem:[%s1] sm:$0xf]
        %v328 = vld [vmem:[#allocation2] sm:$0xff]
        %v329 = vld [vmem:[#allocation2 + $0x8] sm:$0xf]
        %v330 = vld [vmem:[#allocation2 + $0xc] sm:$0xff]
        %v331 = vld [vmem:[#allocation2 + $0x14] sm:$0xf]
        %v332 = vld [vmem:[#allocation2 + $0x18] sm:$0xff]
        %v333 = vld [vmem:[#allocation2 + $0x20] sm:$0xf]
        %v334 = vld [vmem:[#allocation2 + $0x24] sm:$0xff]
        %v335 = vld [vmem:[#allocation2 + $0x2c] sm:$0xf]
        %v336 = vld [vmem:[#allocation2 + $0x30] sm:$0xff]
        %v337 = vld [vmem:[#allocation2 + $0x38] sm:$0xf]
        %v338 = vld [vmem:[#allocation2 + $0x3c] sm:$0xff]
        %v339 = vld [vmem:[#allocation2 + $0x44] sm:$0xf]
        %v340 = vld [vmem:[#allocation2 + $0x48] sm:$0xff]
        %v341 = vld [vmem:[#allocation2 + $0x50] sm:$0xf]
        %v342 = vld [vmem:[#allocation2 + $0x54] sm:$0xff]
        %v343 = vld [vmem:[#allocation2 + $0x5c] sm:$0xf]
        %v344 = vld [vmem:[#allocation2 + $0x60] sm:$0xff]
        %v345 = vld [vmem:[#allocation2 + $0x68] sm:$0xf]
        %v346 = vld [vmem:[%s2] sm:$0xff]
        %348 = vset.pattern.permute.xlu0 0
        %349 = vperm.xlu0 %348, %v346
        %v350 = vpop.permute.xlu0 %349
        %v370 = vunpack.c.l.b16 %v328
        %v371 = vunpack.c.h.b16 %v328
        %v372 = vunpack.c.l.b16 %v329
        %v373 = vunpack.c.l.b16 %v330
        %v374 = vunpack.c.h.b16 %v330
        %v375 = vunpack.c.l.b16 %v331
        %v376 = vunpack.c.l.b16 %v332
        %v377 = vunpack.c.h.b16 %v332
        %v378 = vunpack.c.l.b16 %v333
        %v379 = vunpack.c.l.b16 %v334
        %v380 = vunpack.c.h.b16 %v334
        %v381 = vunpack.c.l.b16 %v335
        %v382 = vunpack.c.l.b16 %v336
        %v383 = vunpack.c.h.b16 %v336
        %v384 = vunpack.c.l.b16 %v337
        %v385 = vunpack.c.l.b16 %v338
        %v386 = vunpack.c.h.b16 %v338
        %v387 = vunpack.c.l.b16 %v339
        %v388 = vunpack.c.l.b16 %v340
        %v389 = vunpack.c.h.b16 %v340
        %v390 = vunpack.c.l.b16 %v341
        %v391 = vunpack.c.l.b16 %v342
        %v392 = vunpack.c.h.b16 %v342
        %v393 = vunpack.c.l.b16 %v343
        %v394 = vunpack.c.l.b16 %v344
        %v395 = vunpack.c.h.b16 %v344
        %v396 = vunpack.c.l.b16 %v345
        %v397 = vpack.c.b16 %v373, %v370
        %v398 = vpack.c.b16 %v374, %v371
        %v399 = vpack.c.b16 %v375, %v372
        %v400 = vpack.c.b16 %v379, %v376
        %v401 = vpack.c.b16 %v380, %v377
        %v402 = vpack.c.b16 %v381, %v378
        %v403 = vpack.c.b16 %v385, %v382
        %v404 = vpack.c.b16 %v386, %v383
        %v405 = vpack.c.b16 %v387, %v384
        %v406 = vpack.c.b16 %v391, %v388
        %v407 = vpack.c.b16 %v392, %v389
        %v408 = vpack.c.b16 %v393, %v390
        %v409 = vpack.c.b16 %v394, %v394
        %v410 = vpack.c.b16 %v395, %v395
        %v411 = vpack.c.b16 %v396, %v396
        %vm424 = vcmask 588800
        %v426 = vsel %vm424, %v327, 0
        %vm428 = vcmask 1043456
        %v430 = vsel %vm428, %v409, 0
        %v433 = vsel %vm428, %v410, 0
        %v436 = vsel %vm428, %v411, 0
        %438 = vmatprep.subr.bf16.mxu0 0
        %439 = vmatpush1.bf16.msra.mxu0 0
        %440 = vmatprep.subr.bf16.mxu0 0
        %441 = vmatpush1.bf16.msra.mxu0 0
        %442 = vmatprep.subr.bf16.mxu0 0
        %443 = vmatpush1.bf16.msra.mxu0 0
        %444 = vmatprep.subr.bf16.mxu0 %v433
        %445 = vmatpush1.bf16.msra.mxu0 %v430
        %446 = vmatprep.subr.bf16.mxu0 %v407
        %447 = vmatpush1.bf16.msra.mxu0 %v406
        %448 = vmatprep.subr.bf16.mxu0 %v404
        %449 = vmatpush1.bf16.msra.mxu0 %v403
        %450 = vmatprep.subr.bf16.mxu0 %v401
        %451 = vmatpush1.bf16.msra.mxu0 %v400
        %452 = vmatprep.subr.bf16.mxu0 %v398
        %453 = vmatpush1.bf16.msra.mxu0 %v397
        %454 = vmatprep.subr.bf16.mxu0 0
        %455 = vmatpush2.bf16.msra.mxu0 0
        %456 = vmatprep.subr.bf16.mxu0 0
        %457 = vmatpush2.bf16.msra.mxu0 0
        %458 = vmatprep.subr.bf16.mxu0 0
        %459 = vmatpush2.bf16.msra.mxu0 0
        %460 = vmatprep.subr.bf16.mxu0 0
        %461 = vmatpush2.bf16.msra.mxu0 0
        %462 = vmatprep.subr.bf16.mxu0 0
        %463 = vmatpush2.bf16.msra.mxu0 0
        %464 = vmatprep.subr.bf16.mxu0 0
        %465 = vmatpush2.bf16.msra.mxu0 0
        %466 = vmatprep.subr.bf16.mxu0 0
        %467 = vmatpush2.bf16.msra.mxu0 0
        %468 = vmatprep.subr.bf16.mxu0 0
        %469 = vmatpush2.bf16.msra.mxu0 0
        %470 = vmatprep.mubr.bf16.mxu0 0
        %471 = vmatmul.mubr.bf16.gmra.mxu0 %v426
        %v472 = vpop.f32.mrf.mxu0
        %v473 = vadd.f32 %v350, %v472
        %v474 = vpop.f32.mrf.mxu0
        %v475 = vadd.f32 %v350, %v474
        %v476 = vpop.f32.mrf.mxu0
        %v477 = vpop.f32.mrf.mxu0
        %478 = vdwg.mxu0
        %479 = vmatprep.subr.bf16.mxu0 0
        %480 = vmatpush1.bf16.msra.mxu0 0
        %481 = vmatprep.subr.bf16.mxu0 0
        %482 = vmatpush1.bf16.msra.mxu0 0
        %483 = vmatprep.subr.bf16.mxu0 0
        %484 = vmatpush1.bf16.msra.mxu0 0
        %485 = vmatprep.subr.bf16.mxu0 0
        %486 = vmatpush1.bf16.msra.mxu0 %v436
        %487 = vmatprep.subr.bf16.mxu0 0
        %488 = vmatpush1.bf16.msra.mxu0 %v408
        %489 = vmatprep.subr.bf16.mxu0 0
        %490 = vmatpush1.bf16.msra.mxu0 %v405
        %491 = vmatprep.subr.bf16.mxu0 0
        %492 = vmatpush1.bf16.msra.mxu0 %v402
        %493 = vmatprep.subr.bf16.mxu0 0
        %494 = vmatpush1.bf16.msra.mxu0 %v399
        %495 = vmatprep.subr.bf16.mxu0 0
        %496 = vmatpush2.bf16.msra.mxu0 0
        %497 = vmatprep.subr.bf16.mxu0 0
        %498 = vmatpush2.bf16.msra.mxu0 0
        %499 = vmatprep.subr.bf16.mxu0 0
        %500 = vmatpush2.bf16.msra.mxu0 0
        %501 = vmatprep.subr.bf16.mxu0 0
        %502 = vmatpush2.bf16.msra.mxu0 0
        %503 = vmatprep.subr.bf16.mxu0 0
        %504 = vmatpush2.bf16.msra.mxu0 0
        %505 = vmatprep.subr.bf16.mxu0 0
        %506 = vmatpush2.bf16.msra.mxu0 0
        %507 = vmatprep.subr.bf16.mxu0 0
        %508 = vmatpush2.bf16.msra.mxu0 0
        %509 = vmatprep.subr.bf16.mxu0 0
        %510 = vmatpush2.bf16.msra.mxu0 0
        %511 = vmatprep.mubr.bf16.mxu0 0
        %512 = vmatmul.mubr.bf16.gmra.mxu0 %v426
        %v513 = vpop.f32.mrf.mxu0
        %v514 = vadd.f32 %v350, %v513
        %v515 = vpop.f32.mrf.mxu0
        %v516 = vpop.f32.mrf.mxu0
        %v517 = vpop.f32.mrf.mxu0
        %518 = vdwg.mxu0
        %v519 = vxor.u32 %v473, 2147483648
        %v520 = vxor.u32 %v475, 2147483648
        %v521 = vxor.u32 %v514, 2147483648
        %v522 = vmul.f32 %v519, 1.442695
        %v523 = vpow.pop %v522
        %v524 = vmul.f32 %v520, 1.442695
        %v525 = vpow.pop %v524
        %v526 = vmul.f32 %v521, 1.442695
        %v527 = vpow.pop %v526
        %v528 = vadd.f32 %v523, 1.0
        %v529 = vadd.f32 %v525, 1.0
        %v530 = vadd.f32 %v527, 1.0
        %v531 = vrcp.pop %v528
        %v532 = vmul.f32 1.0, %v531
        %v533 = vrcp.pop %v529
        %v534 = vmul.f32 1.0, %v533
        %v535 = vrcp.pop %v530
        %v536 = vmul.f32 1.0, %v535
        %v537 = vmul.f32 %v473, %v532
        %v538 = vmul.f32 %v475, %v534
        %v539 = vmul.f32 %v514, %v536
        %v540 = vpack.c.bf16 %v537, %v537
        %v541 = vpack.c.bf16 %v538, %v538
        %v542 = vpack.c.bf16 %v539, %v539
        %v546 = vunpack.c.l.b16 %v540
        %v547 = vunpack.c.l.b16 %v541
        %v548 = vunpack.c.l.b16 %v542
        %v549 = vpack.c.b16 %v547, %v546
        %v550 = vpack.c.b16 %v548, %v548
        %553 = vst [vmem:[%s200] sm:$0xff] %v549
        %554 = vst [vmem:[%s200 + $0x8] sm:$0xf] %v550
        %s555 = sand.u32 %s110, 1
        %s556 = scalar_lea.sflag [#allocation5], %s555
        %s557 = sand.u32 %s110, 1
        %s558 = smul.addr %s557, 12
        %s559 = scalar_lea.vmem [#allocation6], %s558
        // Predicated region
        $region37: #{tpu_custom_call.1} parent=31 // pred_check
          %p560 = pneg %p120
        $region38: #{tpu_custom_call.1} parent=31 // pred_check_branch
          %562 = sbr.rel (%p560) target = $region40
        $region39: #{tpu_custom_call.1} parent=31 // pred_region
          %s563 = smul.u32 3, %s25
          %s565 = ssub.s32 192, 192
          %566 = vsyncadd %s556, %s565
          %s567 = smul.addr %s24, 3
          %s568 = sadd.s32 %s563, %s567
          %s569 = smul.addr %s568, 64
          %s570 = scalar_lea.hbm %s3, %s569
          %s572 = sshll.u32 %s559, 4
          %s573 = int_to_ptr.vmem [resolvable:$true] %s572
          %575 = dma.vmem_to_hbm [thread:$0]  %s573, 192, %s570, %s556
        $region40: #{tpu_custom_call.1} parent=31 // pred_fallthru
          _
      $region32: #{tpu_custom_call.1} parent=5 // pred_fallthru
        _
      %p576 = scmp.le.s32.totalorder 2, %s15
      // Predicated region
      $region41: #{tpu_custom_call.1} parent=5 // pred_check
        %p577 = pneg %p576
      $region42: #{tpu_custom_call.1} parent=5 // pred_check_branch
        %579 = sbr.rel (%p577) target = $region44
      $region43: #{tpu_custom_call.1} parent=5 // pred_region
        %s580 = ssub.s32 %s15, 2
        // Predicated region
        $region45: #{tpu_custom_call.1} parent=43 // pred_check
          %p581 = pneg %p126
        $region46: #{tpu_custom_call.1} parent=43 // pred_check_branch
          %583 = sbr.rel (%p581) target = $region48
        $region47: #{tpu_custom_call.1} parent=43 // pred_region
          %s584 = sand.u32 %s111, 1
          %s585 = scalar_lea.sflag [#allocation5], %s584
          %s586 = sand.u32 %s111, 1
          %s587 = smul.addr %s586, 12
          %s588 = scalar_lea.vmem [#allocation6], %s587
          %589 = dma.done %s585, 192
        $region48: #{tpu_custom_call.1} parent=43 // pred_fallthru
          _
      $region44: #{tpu_custom_call.1} parent=5 // pred_fallthru
        _
    $region6: #{tpu_custom_call.1} parent=1 // loop_footer
      %s19 = sadd.s32 1, %s15
    $region7: #{tpu_custom_call.1} parent=1 // loop_footer_branch
      %14 = sbr.rel target = $region3
    $region8: #{tpu_custom_call.1} parent=1 // loop_exit
      _
    %590 = vsyncpa [#allocation4], 1
    %s591 = scalar_lea.sflag [#allocation4], 1
    %592 = vsyncpa %s591, 1
    %593 = vsyncpa [#allocation5], 1
    %s594 = scalar_lea.sflag [#allocation5], 1
    %595 = vsyncpa %s594, 1

</llo_original>
